<compile_context>
chip_gen: v5e
topology: v5e:2x2
jax: 0.10.0
libtpu: 0.0.40
codegen_flags: <defaults>
</compile_context>

<pallas_src>
import jax
import jax.numpy as jnp
import numpy as np
from jax.experimental import pallas as pl
from jax.experimental.pallas import tpu as pltpu


def self_attention_kernel(x_ref, w_ref, b_ref, rep_ref, scores_ref):
    # x_ref: (Bb, S, H) in VMEM; w_ref: (1, H) in VMEM; b_ref: (1, 1) in SMEM.
    x = x_ref[...]                                   # (Bb, S, H)
    w = w_ref[...]                                   # (1, H)
    bias = b_ref[0, 0]                               # scalar from SMEM (sreg broadcast)

    # Linear(H -> 1): lane reduction over H -> lane-dense (Bb, S) logits.
    logits = jnp.sum(x * w, axis=-1) + bias          # (Bb, S)

    # SiLU activation (Dropout is identity at inference).
    z = logits * jax.nn.sigmoid(logits)              # (Bb, S)

    # Row-wise softmax over the sequence axis (keepdims so it stays per-sequence).
    z = z - jnp.max(z, axis=-1, keepdims=True)
    e = jnp.exp(z)
    denom = jnp.sum(e, axis=-1, keepdims=True)       # (Bb, 1)
    scores = e * pl.reciprocal(denom, approx=True)   # EUP reciprocal; frees VALU slots
    scores_ref[...] = scores.astype(scores_ref.dtype)

    # Weighted sum over the sequence axis -> (Bb, H). VPU path is fine for small S;
    # for S in the hundreds use the MXU instead:
    #   rep = jnp.einsum('bs,bsh->bh', scores, x, preferred_element_type=jnp.float32)
    rep = jnp.sum(x * scores[:, :, None], axis=1)
    rep_ref[...] = rep.astype(rep_ref.dtype)


def _choose_block_batch(B, S, H, itemsize, vmem_budget_bytes=8 * 1024 * 1024):
    """Pick the batch-block size: whole batch if it fits the budget, else a
    multiple-of-8 chunk (sublane constraint for the (Bb, S)/(Bb, H) output blocks).
    The ~8 MiB budget keeps double-buffered tiles well under v7x's 32 MiB scoped VMEM."""
    per_row = 2 * (S * H + S + H) * itemsize         # 2x: double-buffered in/out tiles
    bb = max(1, vmem_budget_bytes // max(per_row, 1))
    if bb >= B:
        return B
    return max(8, min((bb // 8) * 8, B))


def self_attention(x, w, b, *, block_b=None):
    """x: (B, S, H) f32, w: (1, H) f32, b: (1, 1) f32 -> (rep (B, H), scores (B, S))."""
    B, S, H = x.shape
    if block_b is None:
        block_b = _choose_block_batch(B, S, H, jnp.dtype(x.dtype).itemsize)
    grid = (pl.cdiv(B, block_b),)

    rep, scores = pl.pallas_call(
        self_attention_kernel,
        out_shape=(
            jax.ShapeDtypeStruct((B, H), x.dtype),   # representations, lane-dense H
            jax.ShapeDtypeStruct((B, S), x.dtype),   # scores, lane-dense S
        ),
        grid=grid,
        in_specs=[
            pl.BlockSpec((block_b, S, H), lambda i: (i, 0, 0)),          # batched x block
            pl.BlockSpec((1, H), lambda i: (0, 0)),                      # weight (replicated)
            pl.BlockSpec(memory_space=pltpu.MemorySpace.SMEM),           # scalar bias in SMEM
        ],
        out_specs=(
            pl.BlockSpec((block_b, H), lambda i: (i, 0)),                # rep
            pl.BlockSpec((block_b, S), lambda i: (i, 0)),                # scores
        ),
        compiler_params=pltpu.CompilerParams(
            dimension_semantics=("parallel",),       # v7x: 2 TCs split batch blocks
        ),
    )(x, w, b)
    return rep, scores


def reference(x, w, b):
    logits = jnp.einsum("bsh,oh->bso", x, w) + b[0, 0]   # (B, S, 1)
    z = logits * jax.nn.sigmoid(logits)
    scores = jax.nn.softmax(z[..., 0], axis=-1)          # (B, S)
    rep = jnp.sum(x * scores[..., None], axis=1)         # (B, H)
    return rep, scores


if __name__ == "__main__":
    B, S, H = 2, 8, 32  # batch, seq, attention_size
    key = jax.random.PRNGKey(0)
    kx, kw = jax.random.split(key)

    x = jax.random.normal(kx, (B, S, H), dtype=jnp.float32)
    # Deterministic init matching init_weights: weight ~ U(-0.1, 0.1), bias = 0.01
    w = jax.random.uniform(kw, (1, H), dtype=jnp.float32, minval=-0.1, maxval=0.1)
    b = jnp.full((1, 1), 0.01, dtype=jnp.float32)

    rep, scores = self_attention(x, w, b)
    jax.block_until_ready((rep, scores))

    rep_ref, scores_ref = reference(x, w, b)
    # Tolerance accounts for the EUP approximate reciprocal in the softmax normalization.
    np.testing.assert_allclose(np.asarray(scores), np.asarray(scores_ref), rtol=1e-3, atol=1e-3)
    np.testing.assert_allclose(np.asarray(rep), np.asarray(rep_ref), rtol=1e-3, atol=1e-3)

    print("KERNEL_OK")
</pallas_src>

<mosaic_0001>
module attributes {stable_mosaic.version = 11 : i64} {
  func.func @self_attention_kernel(%arg0: i32, %arg1: memref<2x8x32xf32, #tpu.memory_space<vmem>>, %arg2: memref<1x32xf32, #tpu.memory_space<vmem>>, %arg3: memref<1x1xf32, #tpu.memory_space<smem>>, %arg4: memref<2x32xf32, #tpu.memory_space<vmem>>, %arg5: memref<2x8xf32, #tpu.memory_space<vmem>>) attributes {dimension_semantics = [#tpu.dimension_semantics<parallel>], iteration_bounds = array<i64: 1>, scalar_prefetch = 0 : i64, scratch_operands = 0 : i64, tpu.core_type = #tpu.core_type<tc>, window_params = [{transform_indices = @transform_0, window_bounds = array<i64: 2, 8, 32>}, {pipeline_mode = #tpu.pipeline_mode<synchronous>, transform_indices = @transform_1, window_bounds = array<i64: 1, 32>}, {transform_indices = @transform_2, window_bounds = array<i64: 1, 1>}, {transform_indices = @transform_3, window_bounds = array<i64: 2, 32>}, {transform_indices = @transform_4, window_bounds = array<i64: 2, 8>}]} {
    %c0 = arith.constant 0 : index
    %c0_0 = arith.constant 0 : index
    %c0_1 = arith.constant 0 : index
    %0 = vector.load %arg1[%c0, %c0_0, %c0_1] : memref<2x8x32xf32, #tpu.memory_space<vmem>>, vector<2x8x32xf32>
    %c0_2 = arith.constant 0 : index
    %c0_3 = arith.constant 0 : index
    %1 = vector.load %arg2[%c0_2, %c0_3] : memref<1x32xf32, #tpu.memory_space<vmem>>, vector<1x32xf32>
    %c0_4 = arith.constant 0 : index
    %c0_5 = arith.constant 0 : index
    %2 = memref.load %arg3[%c0_4, %c0_5] : memref<1x1xf32, #tpu.memory_space<smem>>
    %3 = vector.shape_cast %1 : vector<1x32xf32> to vector<1x1x32xf32>
    %4 = vector.broadcast %3 : vector<1x1x32xf32> to vector<2x8x32xf32>
    %5 = arith.mulf %0, %4 : vector<2x8x32xf32>
    %cst = arith.constant dense<0.000000e+00> : vector<2x8xf32>
    %6 = vector.multi_reduction <add>, %5, %cst [2] : vector<2x8x32xf32> to vector<2x8xf32>
    %7 = vector.broadcast %2 : f32 to vector<2x8xf32>
    %8 = arith.addf %6, %7 : vector<2x8xf32>
    %9 = arith.negf %8 : vector<2x8xf32>
    %10 = math.exp %9 : vector<2x8xf32>
    %cst_6 = arith.constant 1.000000e+00 : f32
    %11 = vector.broadcast %cst_6 : f32 to vector<2x8xf32>
    %12 = arith.addf %11, %10 : vector<2x8xf32>
    %13 = arith.divf %11, %12 : vector<2x8xf32>
    %14 = arith.mulf %8, %13 : vector<2x8xf32>
    %cst_7 = arith.constant dense<0xFF800000> : vector<2xf32>
    %15 = vector.multi_reduction <maximumf>, %14, %cst_7 [1] : vector<2x8xf32> to vector<2xf32>
    %16 = vector.shape_cast %15 : vector<2xf32> to vector<2x1xf32>
    %17 = vector.broadcast %16 : vector<2x1xf32> to vector<2x8xf32>
    %18 = arith.subf %14, %17 : vector<2x8xf32>
    %19 = math.exp %18 : vector<2x8xf32>
    %cst_8 = arith.constant dense<0.000000e+00> : vector<2xf32>
    %20 = vector.multi_reduction <add>, %19, %cst_8 [1] : vector<2x8xf32> to vector<2xf32>
    %21 = vector.shape_cast %20 : vector<2xf32> to vector<2x1xf32>
    %22 = tpu.reciprocal %21 {approx = true} : vector<2x1xf32> -> vector<2x1xf32>
    %23 = vector.broadcast %22 : vector<2x1xf32> to vector<2x8xf32>
    %24 = arith.mulf %19, %23 : vector<2x8xf32>
    %c0_9 = arith.constant 0 : index
    %c0_10 = arith.constant 0 : index
    %25 = vector.load %arg5[%c0_9, %c0_10] : memref<2x8xf32, #tpu.memory_space<vmem>>, vector<2x8xf32>
    tpu.vector_store %arg5[%c0_9, %c0_10], %24 {strides = array<i32>} : memref<2x8xf32, #tpu.memory_space<vmem>>, vector<2x8xf32>,
    %26 = vector.shape_cast %24 : vector<2x8xf32> to vector<2x8x1xf32>
    %27 = vector.broadcast %26 : vector<2x8x1xf32> to vector<2x8x32xf32>
    %28 = arith.mulf %0, %27 : vector<2x8x32xf32>
    %cst_11 = arith.constant dense<0.000000e+00> : vector<2x32xf32>
    %29 = vector.multi_reduction <add>, %28, %cst_11 [1] : vector<2x8x32xf32> to vector<2x32xf32>
    %c0_12 = arith.constant 0 : index
    %c0_13 = arith.constant 0 : index
    %30 = vector.load %arg4[%c0_12, %c0_13] : memref<2x32xf32, #tpu.memory_space<vmem>>, vector<2x32xf32>
    tpu.vector_store %arg4[%c0_12, %c0_13], %29 {strides = array<i32>} : memref<2x32xf32, #tpu.memory_space<vmem>>, vector<2x32xf32>,
    return
  }
  func.func @transform_0(%arg0: i32) -> (i32, i32, i32) {
    %c0_i32 = arith.constant 0 : i32
    %c0_i32_0 = arith.constant 0 : i32
    %c0_i32_1 = arith.constant 0 : i32
    return %arg0, %c0_i32, %c0_i32_0 : i32, i32, i32
  }
  func.func @transform_1(%arg0: i32) -> (i32, i32) {
    %c0_i32 = arith.constant 0 : i32
    %c0_i32_0 = arith.constant 0 : i32
    %c0_i32_1 = arith.constant 0 : i32
    return %c0_i32, %c0_i32_0 : i32, i32
  }
  func.func @transform_2(%arg0: i32) -> (i32, i32) {
    %c0_i32 = arith.constant 0 : i32
    %c0_i32_0 = arith.constant 0 : i32
    %c0_i32_1 = arith.constant 0 : i32
    return %c0_i32, %c0_i32_0 : i32, i32
  }
  func.func @transform_3(%arg0: i32) -> (i32, i32) {
    %c0_i32 = arith.constant 0 : i32
    %c0_i32_0 = arith.constant 0 : i32
    return %arg0, %c0_i32 : i32, i32
  }
  func.func @transform_4(%arg0: i32) -> (i32, i32) {
    %c0_i32 = arith.constant 0 : i32
    %c0_i32_0 = arith.constant 0 : i32
    return %arg0, %c0_i32 : i32, i32
  }
}

</mosaic_0001>

<llo_original>
// kernel: tpu_custom_call.1
$region0: #{tpu_custom_call.1}
  #allocation0 [shape = 'u32[]', space=smem, size = 0x4, offset = 0x4, fixed_abs, tag = 'smem constant byte address 0x4 - core index']
  #allocation1 [shape = 'u32[72,128]{1,0:T(1,128)}', space=vmem, size = 0x9000, scoped, tag = 'internal scratch']
  #allocation2 [shape = 'f32[1,1]{1,0:T(1,128)S(6)}', space=smem, size = 0x200, scoped, tag = 'scoped memory for tpu_custom_call.1']
  %s0 = inlined_call_operand.hbm [shape: f32[2,8,32], index: 0, kind: input, shape index: {}]
  %s1 = inlined_call_operand.vmem [shape: f32[1,32], index: 1, kind: input, shape index: {}]
  %s2 = inlined_call_operand.<no memory space> [shape: f32[1,1], index: 2, kind: input, shape index: {}]
  %s3 = inlined_call_operand.hbm [shape: f32[2,32], index: 3, kind: output, shape index: {0}]
  %s4 = inlined_call_operand.hbm [shape: f32[2,8], index: 4, kind: output, shape index: {1}]
  %5 = xla_tuple %s3, %s4
  %s6 = sld [smem:[#allocation0]]
  $region34: #{tpu_custom_call.1} parent=0
    _
  %s8 = ssub.s32 1, %s6
  %s9 = scalar_select 0, %s8, %s6
  %10 = sst [smem:[#allocation2]] %s2
  $region1: #{tpu_custom_call.1} parent=0
    #allocation3 [shape = 'u8[8192]{0}', space=vmem, size = 0x2000, scoped, tag = 'input window, operand 0, single buffered']
    #allocation4 [shape = 's32[1]{0}', space=sflag, size = 0x4, scoped, tag = 'scoped memory for tpu_custom_call.1']
    #allocation5 [shape = 's32[1]{0}', space=sflag, size = 0x4, scoped, tag = 'scoped memory for tpu_custom_call.1']
    #allocation6 [shape = 'u8[1024]{0}', space=vmem, size = 0x400, scoped, tag = 'output window, operand 0, single buffered']
    #allocation7 [shape = 'u8[1024]{0}', space=vmem, size = 0x400, scoped, tag = 'output window, operand 1, single buffered']
    #allocation8 [shape = 's32[1]{0}', space=sflag, size = 0x4, scoped, tag = 'scoped memory for tpu_custom_call.1']
    %11 = vsyncpa [#allocation4], 0
    %12 = vsyncpa [#allocation5], 0
    %13 = vsyncpa [#allocation8], 0
    // Predicated region
    $region2: #{tpu_custom_call.1} parent=1 // pred_check
      _
    $region3: #{tpu_custom_call.1} parent=1 // pred_check_branch
      %15 = sbr.rel (0) target = $region5
    $region4: #{tpu_custom_call.1} parent=1 // pred_region
      %17 = vsyncadd [#allocation4], 0
      %s18 = sshll.u32 %s0, 4
      %s19 = int_to_ptr.hbm [resolvable:$true] %s18
      %s20 = sshll.u32 [#allocation3], 4
      %s21 = int_to_ptr.vmem [resolvable:$true] %s20
      %26 = dma.hbm_to_vmem [thread:$0]  %s19, 256, %s21, [#allocation4], 128, 128, 8
    $region5: #{tpu_custom_call.1} parent=1 // pred_fallthru
      _
    // Predicated region
    $region6: #{tpu_custom_call.1} parent=1 // pred_check
      _
    $region7: #{tpu_custom_call.1} parent=1 // pred_check_branch
      %28 = sbr.rel (0) target = $region9
    $region8: #{tpu_custom_call.1} parent=1 // pred_region
      _
    $region9: #{tpu_custom_call.1} parent=1 // pred_fallthru
      _
    // Predicated region
    $region10: #{tpu_custom_call.1} parent=1 // pred_check
      _
    $region11: #{tpu_custom_call.1} parent=1 // pred_check_branch
      %30 = sbr.rel (0) target = $region13
    $region12: #{tpu_custom_call.1} parent=1 // pred_region
      _
    $region13: #{tpu_custom_call.1} parent=1 // pred_fallthru
      _
    // Predicated region
    $region14: #{tpu_custom_call.1} parent=1 // pred_check
      _
    $region15: #{tpu_custom_call.1} parent=1 // pred_check_branch
      %32 = sbr.rel (0) target = $region17
    $region16: #{tpu_custom_call.1} parent=1 // pred_region
      %34 = dma.done [#allocation4], 256
    $region17: #{tpu_custom_call.1} parent=1 // pred_fallthru
      _
    %v35 = vld [vmem:[#allocation3] sm:$0xff]
    %v36 = vld [vmem:[#allocation3 + $0x8] sm:$0xff]
    %v37 = vld [vmem:[%s1] sm:$0x1]
    %s38 = sld [smem:[#allocation2]]
    %v40 = vperm.slane %v37, 0
    %v42 = vmul.f32 %v35, %v40
    %v43 = vmul.f32 %v36, %v40
    %vm44 = vcmask 261120
    %v45 = vsel %vm44, %v42, 0.0
    %46 = vadd.xlane.f32.xlu0 %v45
    %v47 = vpop.xlane.xlu0 %46
    %v48 = vsel %vm44, %v43, 0.0
    %49 = vadd.xlane.f32.xlu0 %v48
    %v50 = vpop.xlane.xlu0 %49
    %v51 = vstv %s38
    %v52 = vadd.f32 %v47, %v51
    %v53 = vadd.f32 %v50, %v51
    %v54 = vxor.u32 %v52, 2147483648
    %v55 = vxor.u32 %v53, 2147483648
    %v56 = vmul.f32 %v54, 1.442695
    %v57 = vpow.pop %v56
    %v58 = vmul.f32 %v55, 1.442695
    %v59 = vpow.pop %v58
    %v60 = vadd.f32 %v57, 1.0
    %v61 = vadd.f32 %v59, 1.0
    %v62 = vrcp.pop %v60
    %v63 = vmul.f32 %v60, %v62
    %v64 = vsub.f32 1.0, %v63
    %v65 = vmul.f32 %v62, %v64
    %v66 = vadd.f32 %v62, %v65
    %vm67 = vweird.f32 %v60
    %vm68 = vweird.f32 %v62
    %vm69 = vmor %vm67, %vm68
    %v70 = vsel %vm69, %v62, %v66
    %v71 = vand.u32 2147483647, %v60
    %vm72 = vcmp.eq.f32.partialorder %v71, 8.507059e+37
    %v73 = vand.u32 %v60, 2147483648
    %v74 = vor.u32 1.1754944e-38, %v73
    %v75 = vsel %vm72, %v74, %v70
    %v76 = vmul.f32 1.0, %v75
    %v77 = vrcp.pop %v61
    %v78 = vmul.f32 %v61, %v77
    %v79 = vsub.f32 1.0, %v78
    %v80 = vmul.f32 %v77, %v79
    %v81 = vadd.f32 %v77, %v80
    %vm82 = vweird.f32 %v61
    %vm83 = vweird.f32 %v77
    %vm84 = vmor %vm82, %vm83
    %v85 = vsel %vm84, %v77, %v81
    %v86 = vand.u32 2147483647, %v61
    %vm87 = vcmp.eq.f32.partialorder %v86, 8.507059e+37
    %v88 = vand.u32 %v61, 2147483648
    %v89 = vor.u32 1.1754944e-38, %v88
    %v90 = vsel %vm87, %v89, %v85
    %v91 = vmul.f32 1.0, %v90
    %v92 = vmul.f32 %v52, %v76
    %v93 = vmul.f32 %v53, %v91
    %v96 = vlaneseq
    %v97 = vand.u32 %v96, 127
    %v98 = vperm.slane %v92, %v97
    %v99 = vperm.slane %v93, %v97
    %vm100 = vcmask 1041409
    %v101 = vsel %vm100, %v99, %v98
    %vm103 = vcmask 58368
    %v104 = vsel %vm103, %v101, -inf
    %105 = vmax.xlane.f32.xlu0 %v104
    %v106 = vpop.xlane.xlu0 %105
    %v108 = vperm.slane %v106, 0
    %v109 = vperm.slane %v106, 1
    %v112 = vsub.f32 %v92, %v108
    %v113 = vsub.f32 %v93, %v109
    %v114 = vmul.f32 %v112, 1.442695
    %v115 = vpow.pop %v114
    %v116 = vmul.f32 %v113, 1.442695
    %v117 = vpow.pop %v116
    %120 = vset.pattern.permute.xlu0 0
    %121 = vperm.xlu0 %120, %v115
    %v122 = vpop.permute.xlu0 %121
    %123 = vset.pattern.permute.xlu0 0
    %124 = vperm.xlu0 %123, %v117
    %v125 = vpop.permute.xlu0 %124
    %v126 = vperm.slane %v122, %v97
    %v127 = vperm.slane %v125, %v97
    %v128 = vsel %vm100, %v127, %v126
    %v130 = vsel %vm103, %v128, 0.0
    %131 = vadd.xlane.f32.xlu0 %v130
    %v132 = vpop.xlane.xlu0 %131
    %v133 = vrcp.pop %v132
    %v135 = vperm.slane %v133, 0
    %v136 = vperm.slane %v133, 1
    %v139 = vmul.f32 %v115, %v135
    %v140 = vmul.f32 %v117, %v136
    %143 = vset.pattern.permute.xlu0 0
    %144 = vperm.xlu0 %143, %v139
    %v145 = vpop.permute.xlu0 %144
    %146 = vset.pattern.permute.xlu0 0
    %147 = vperm.xlu0 %146, %v140
    %v148 = vpop.permute.xlu0 %147
    %v149 = vperm.slane %v145, %v97
    %v150 = vperm.slane %v148, %v97
    %v151 = vsel %vm100, %v150, %v149
    %153 = vst.msk [vmem:[#allocation7] sm:$0x3] %vm103, %v151
    %v156 = vmul.f32 %v35, %v145
    %v157 = vmul.f32 %v36, %v148
    %v158 = vsel %vm44, %v156, 0.0
    %v159 = vrot.slane %v158, 4
    %v160 = vadd.f32 %v158, %v159
    %v161 = vrot.slane %v160, 2
    %v162 = vadd.f32 %v160, %v161
    %v163 = vrot.slane %v162, 1
    %v164 = vadd.f32 %v162, %v163
    %v165 = vsel %vm44, %v157, 0.0
    %v166 = vrot.slane %v165, 4
    %v167 = vadd.f32 %v165, %v166
    %v168 = vrot.slane %v167, 2
    %v169 = vadd.f32 %v167, %v168
    %v170 = vrot.slane %v169, 1
    %v171 = vadd.f32 %v169, %v170
    %v174 = vsel %vm100, %v171, %v164
    %vm176 = vcmask 254976
    %177 = vst.msk [vmem:[#allocation6] sm:$0x3] %vm176, %v174
    // Predicated region
    $region18: #{tpu_custom_call.1} parent=1 // pred_check
      _
    $region19: #{tpu_custom_call.1} parent=1 // pred_check_branch
      %179 = sbr.rel (0) target = $region21
    $region20: #{tpu_custom_call.1} parent=1 // pred_region
      %181 = vsyncadd [#allocation5], 0
      %s183 = sshll.u32 [#allocation6], 4
      %s184 = int_to_ptr.vmem [resolvable:$true] %s183
      %s185 = sshll.u32 %s3, 4
      %s186 = int_to_ptr.hbm [resolvable:$true] %s185
      %188 = dma.vmem_to_hbm [thread:$0]  %s184, 32, %s186, [#allocation5]
    $region21: #{tpu_custom_call.1} parent=1 // pred_fallthru
      _
    // Predicated region
    $region22: #{tpu_custom_call.1} parent=1 // pred_check
      _
    $region23: #{tpu_custom_call.1} parent=1 // pred_check_branch
      %190 = sbr.rel (0) target = $region25
    $region24: #{tpu_custom_call.1} parent=1 // pred_region
      %192 = vsyncadd [#allocation8], 0
      %s194 = sshll.u32 [#allocation7], 4
      %s195 = int_to_ptr.vmem [resolvable:$true] %s194
      %s196 = sshll.u32 %s4, 4
      %s197 = int_to_ptr.hbm [resolvable:$true] %s196
      %199 = dma.vmem_to_hbm [thread:$0]  %s195, 32, %s197, [#allocation8]
    $region25: #{tpu_custom_call.1} parent=1 // pred_fallthru
      _
    // Predicated region
    $region26: #{tpu_custom_call.1} parent=1 // pred_check
      _
    $region27: #{tpu_custom_call.1} parent=1 // pred_check_branch
      %201 = sbr.rel (0) target = $region29
    $region28: #{tpu_custom_call.1} parent=1 // pred_region
      %203 = dma.done [#allocation5], 32
    $region29: #{tpu_custom_call.1} parent=1 // pred_fallthru
      _
    // Predicated region
    $region30: #{tpu_custom_call.1} parent=1 // pred_check
      _
    $region31: #{tpu_custom_call.1} parent=1 // pred_check_branch
      %205 = sbr.rel (0) target = $region33
    $region32: #{tpu_custom_call.1} parent=1 // pred_region
      %207 = dma.done [#allocation8], 32
    $region33: #{tpu_custom_call.1} parent=1 // pred_fallthru
      _
    %208 = vsyncpa [#allocation4], 1
    %209 = vsyncpa [#allocation5], 1
    %210 = vsyncpa [#allocation8], 1

</llo_original>
